<compile_context>
chip_gen: v7x
topology: tpu7x:2x2x1
jax: 0.10.0
libtpu: 0.0.40
codegen_flags: <defaults>
</compile_context>

<pallas_src>
import functools

import jax
import jax.numpy as jnp
from jax import lax
from jax.experimental import pallas as pl
from jax.experimental.pallas import tpu as pltpu

_ALPHA = 0.2  # nn.ELU(alpha=0.2) per the PyTorch module


def _resolve_elementwise_dtype(elementwise):
    """bf16 elementwise (ELU) on chips with bf16 VPU/EUP (v6e, v7x); f32 otherwise."""
    if elementwise == "float32":
        return jnp.float32
    if elementwise == "bfloat16":
        return jnp.bfloat16
    try:
        kind = jax.devices()[0].device_kind.lower()
    except Exception:
        return jnp.float32
    if any(old in kind for old in ("v2", "v3", "v4", "v5")):
        return jnp.float32
    return jnp.bfloat16


def _elu_bias_act(acc_f32, bias_f32, ew_dtype):
    """f32 bias add, ELU(alpha=0.2) in `ew_dtype`, returned as a bf16 MXU operand.

    exp argument is clamped to <= 0 so the unselected branch of the where never
    overflows (also keeps padded rows of a partial batch tile finite)."""
    h = (acc_f32 + bias_f32).astype(ew_dtype)
    neg = _ALPHA * (jnp.exp(jnp.minimum(h, 0)) - 1)
    return jnp.where(h > 0, h, neg).astype(jnp.bfloat16)


def _generator_kernel(x_ref, w1_ref, b1_ref, w2_ref, b2_ref,
                      w3_ref, b3_ref, w4_ref, b4_ref, o_ref, *, ew_dtype):
    # x tile: (tb, z_dim) f32 straight from HBM; cast to bf16 here (in-kernel),
    # so there is no separate wrapper-side HBM cast pass over x.
    x = x_ref[...].astype(jnp.bfloat16)

    # Transposed compute: activations are (features, batch_tile) so the batch
    # occupies the 128-lane axis (dense lanes, dense output stores).
    # Layer 1: h^T = W1 @ x^T via dot_general contracting both last dims.
    h = lax.dot_general(w1_ref[...], x, (((1,), (1,)), ((), ())),
                        preferred_element_type=jnp.float32)        # (hidden, tb) f32
    h = _elu_bias_act(h, b1_ref[...], ew_dtype)                    # (hidden, tb) bf16

    h = jnp.dot(w2_ref[...], h, preferred_element_type=jnp.float32)
    h = _elu_bias_act(h, b2_ref[...], ew_dtype)

    h = jnp.dot(w3_ref[...], h, preferred_element_type=jnp.float32)
    h = _elu_bias_act(h, b3_ref[...], ew_dtype)

    out = jnp.dot(w4_ref[...], h, preferred_element_type=jnp.float32)
    out = out + b4_ref[...]                                        # (data_dim, tb) f32
    o_ref[...] = out.astype(o_ref.dtype)


def _pick_batch_tile(B, block_batch, hidden, data_dim, vmem_budget=20 << 20):
    """Padding-aware batch-tile pick.

    Batch rows sit on the lane axis of the output block and intermediates, so
    the tile granule is 128 (also covers the x block's sublane-of-8 rule).
    The per-row estimate counts the lane/sublane padding of the blocks and the
    double buffering; the ~20 MiB budget is v7x-safe (32 MiB scoped default)."""
    lane = 128
    pad8 = lambda n: -(-n // 8) * 8
    per_row = (2 * lane * 4              # x block: z_dim lanes padded to 128, double-buffered
               + 2 * pad8(data_dim) * 4  # out block: data_dim sublanes padded to 8, x2 buffers
               + 4 * hidden * 4)         # live (hidden, tb) f32/bf16 temporaries in-kernel
    max_rows = max(lane, (vmem_budget // per_row) // lane * lane)
    tb = min(block_batch, max_rows)
    if B <= tb:
        return B  # single grid step; block == full array, no divisibility constraint
    return max(lane, (tb // lane) * lane)


@functools.partial(jax.jit, static_argnames=("block_batch", "elementwise"))
def generator25g_forward(x, params, block_batch=8192, elementwise="auto"):
    """Fused Generator25G forward as a single Pallas kernel.

    x: (B, z_dim) float32.
    params: kernel-ready params from prepare_params(): w_i bf16 (out, in),
            b_i f32 (out, 1).
    Returns (B, data_dim) float32."""
    B, z_dim = x.shape
    hidden = params["w1"].shape[0]
    data_dim = params["w4"].shape[0]
    ew_dtype = _resolve_elementwise_dtype(elementwise)

    tb = _pick_batch_tile(B, block_batch, hidden, data_dim)
    grid = (pl.cdiv(B, tb),)

    def resident(shape):
        # Constant block index -> Pallas keeps the tiny weight/bias buffers
        # resident in VMEM across all grid steps (no per-step re-DMA).
        return pl.BlockSpec(shape, lambda i: (0, 0))

    flops = 2 * B * (z_dim * hidden + 2 * hidden * hidden + hidden * data_dim)
    transcendentals = 3 * B * hidden
    bytes_accessed = (B * z_dim * 4 + B * data_dim * 4
                      + (z_dim * hidden + 2 * hidden * hidden
                         + hidden * data_dim) * 2
                      + (3 * hidden + data_dim) * 4)

    out_t = pl.pallas_call(
        functools.partial(_generator_kernel, ew_dtype=ew_dtype),
        out_shape=jax.ShapeDtypeStruct((data_dim, B), jnp.float32),
        grid_spec=pltpu.PrefetchScalarGridSpec(
            num_scalar_prefetch=0,
            grid=grid,
            in_specs=[
                pl.BlockSpec((tb, z_dim), lambda i: (i, 0)),            # x tile (f32)
                resident((hidden, z_dim)), resident((hidden, 1)),       # l1
                resident((hidden, hidden)), resident((hidden, 1)),      # l2
                resident((hidden, hidden)), resident((hidden, 1)),      # l3
                resident((data_dim, hidden)), resident((data_dim, 1)),  # l4
            ],
            out_specs=pl.BlockSpec((data_dim, tb), lambda i: (0, i)),
        ),
        compiler_params=pltpu.CompilerParams(
            dimension_semantics=("parallel",),
            vmem_limit_bytes=32 << 20),
        cost_estimate=pl.CostEstimate(flops=flops,
                                      transcendentals=transcendentals,
                                      bytes_accessed=bytes_accessed),
    )(x, params["w1"], params["b1"], params["w2"], params["b2"],
      params["w3"], params["b3"], params["w4"], params["b4"])

    # Back to the module's (B, data_dim) layout (cheap: B x data_dim f32).
    return out_t.T


def init_params(key, z_dim, hidden_size, data_dim):
    """f32 master params, PyTorch nn.Linear layout/init: W (out, in), b (out,),
    uniform(-1/sqrt(fan_in), +1/sqrt(fan_in))."""
    def linear(k, fan_in, fan_out):
        kw, kb = jax.random.split(k)
        bound = 1.0 / (fan_in ** 0.5)
        w = jax.random.uniform(kw, (fan_out, fan_in), jnp.float32, -bound, bound)
        b = jax.random.uniform(kb, (fan_out,), jnp.float32, -bound, bound)
        return w, b

    k1, k2, k3, k4 = jax.random.split(key, 4)
    w1, b1 = linear(k1, z_dim, hidden_size)
    w2, b2 = linear(k2, hidden_size, hidden_size)
    w3, b3 = linear(k3, hidden_size, hidden_size)
    w4, b4 = linear(k4, hidden_size, data_dim)
    return dict(w1=w1, b1=b1, w2=w2, b2=b2, w3=w3, b3=b3, w4=w4, b4=b4)


def prepare_params(params_f32):
    """One-time cast to kernel dtypes/layout (outside the jitted forward):
    weights -> bf16 (out, in); biases -> f32 (out, 1) columns."""
    out = {}
    for i in range(1, 5):
        out[f"w{i}"] = params_f32[f"w{i}"].astype(jnp.bfloat16)
        out[f"b{i}"] = params_f32[f"b{i}"].reshape(-1, 1).astype(jnp.float32)
    return out


def reference_forward_f32(x, params_f32):
    """True f32 reference (PyTorch-module semantics)."""
    def elu(v):
        return jnp.where(v > 0, v, _ALPHA * (jnp.exp(jnp.minimum(v, 0.0)) - 1.0))
    h = x
    for i in (1, 2, 3):
        h = elu(h @ params_f32[f"w{i}"].T + params_f32[f"b{i}"])
    return h @ params_f32["w4"].T + params_f32["b4"]


def reference_forward_mirror(x, kparams, ew_dtype):
    """Plain-JAX mirror of the kernel numerics: bf16 MXU operands, f32
    accumulation, f32 bias add, ELU in `ew_dtype`."""
    h = x.astype(jnp.bfloat16)
    for i in (1, 2, 3):
        acc = jnp.dot(h, kparams[f"w{i}"].T, preferred_element_type=jnp.float32)
        acc = acc + kparams[f"b{i}"][:, 0]
        a = acc.astype(ew_dtype)
        a = jnp.where(a > 0, a, _ALPHA * (jnp.exp(jnp.minimum(a, 0)) - 1))
        h = a.astype(jnp.bfloat16)
    acc = jnp.dot(h, kparams["w4"].T, preferred_element_type=jnp.float32)
    return acc + kparams["b4"][:, 0]


if __name__ == "__main__":
    # Small shapes consistent with the module: z_dim=16, hidden=32, data_dim=4.
    z_dim, hidden_size, data_dim = 16, 32, 4

    key = jax.random.PRNGKey(0)
    kparam_key, kx1, kx2 = jax.random.split(key, 3)
    params = init_params(kparam_key, z_dim, hidden_size, data_dim)
    kparams = prepare_params(params)  # cast once, outside the jitted forward

    # 1) Tiny batch, single grid step; force f32 elementwise for chip-independent numerics.
    x1 = jax.random.normal(kx1, (8, z_dim), jnp.float32)
    y1 = jax.block_until_ready(generator25g_forward(x1, kparams, elementwise="float32"))
    assert y1.shape == (8, data_dim)
    m1 = reference_forward_mirror(x1, kparams, jnp.float32)
    r1 = reference_forward_f32(x1, params)
    assert jnp.allclose(y1, m1, atol=2e-3, rtol=2e-3), "mismatch vs kernel-numerics reference (small)"
    assert float(jnp.max(jnp.abs(y1 - r1))) < 5e-2, "drift vs true f32 reference too large (small)"

    # 2) Multi-tile batch (grid=2) with a partial, masked last block (200 = 128 + 72).
    x2 = jax.random.normal(kx2, (200, z_dim), jnp.float32)
    y2 = jax.block_until_ready(
        generator25g_forward(x2, kparams, block_batch=128, elementwise="float32"))
    assert y2.shape == (200, data_dim)
    m2 = reference_forward_mirror(x2, kparams, jnp.float32)
    r2 = reference_forward_f32(x2, params)
    assert jnp.allclose(y2, m2, atol=2e-3, rtol=2e-3), "mismatch vs kernel-numerics reference (tiled)"
    assert float(jnp.max(jnp.abs(y2 - r2))) < 5e-2, "drift vs true f32 reference too large (tiled)"

    # 3) Default "auto" path (bf16 ELU on v6e/v7x, f32 on v5 and older).
    y3 = jax.block_until_ready(generator25g_forward(x2, kparams))
    assert y3.shape == (200, data_dim)
    assert float(jnp.max(jnp.abs(y3 - r2))) < 6e-2, "drift vs true f32 reference too large (auto)"

    print("KERNEL_OK")
</pallas_src>

<mosaic_0001>
module attributes {stable_mosaic.version = 11 : i64} {
  func.func @_generator_kernel(%arg0: i32, %arg1: memref<8x16xf32, #tpu.memory_space<vmem>>, %arg2: memref<32x16xbf16, #tpu.memory_space<vmem>>, %arg3: memref<32x1xf32, #tpu.memory_space<vmem>>, %arg4: memref<32x32xbf16, #tpu.memory_space<vmem>>, %arg5: memref<32x1xf32, #tpu.memory_space<vmem>>, %arg6: memref<32x32xbf16, #tpu.memory_space<vmem>>, %arg7: memref<32x1xf32, #tpu.memory_space<vmem>>, %arg8: memref<4x32xbf16, #tpu.memory_space<vmem>>, %arg9: memref<4x1xf32, #tpu.memory_space<vmem>>, %arg10: memref<4x8xf32, #tpu.memory_space<vmem>>) attributes {dimension_semantics = [#tpu.dimension_semantics<parallel>], iteration_bounds = array<i64: 1>, scalar_prefetch = 0 : i64, scratch_operands = 0 : i64, tpu.core_type = #tpu.core_type<tc>, window_params = [{transform_indices = @transform_0, window_bounds = array<i64: 8, 16>}, {pipeline_mode = #tpu.pipeline_mode<synchronous>, transform_indices = @transform_1, window_bounds = array<i64: 32, 16>}, {pipeline_mode = #tpu.pipeline_mode<synchronous>, transform_indices = @transform_2, window_bounds = array<i64: 32, 1>}, {pipeline_mode = #tpu.pipeline_mode<synchronous>, transform_indices = @transform_3, window_bounds = array<i64: 32, 32>}, {pipeline_mode = #tpu.pipeline_mode<synchronous>, transform_indices = @transform_4, window_bounds = array<i64: 32, 1>}, {pipeline_mode = #tpu.pipeline_mode<synchronous>, transform_indices = @transform_5, window_bounds = array<i64: 32, 32>}, {pipeline_mode = #tpu.pipeline_mode<synchronous>, transform_indices = @transform_6, window_bounds = array<i64: 32, 1>}, {pipeline_mode = #tpu.pipeline_mode<synchronous>, transform_indices = @transform_7, window_bounds = array<i64: 4, 32>}, {pipeline_mode = #tpu.pipeline_mode<synchronous>, transform_indices = @transform_8, window_bounds = array<i64: 4, 1>}, {transform_indices = @transform_9, window_bounds = array<i64: 4, 8>}]} {
    %c0 = arith.constant 0 : index
    %c0_0 = arith.constant 0 : index
    %0 = vector.load %arg1[%c0, %c0_0] : memref<8x16xf32, #tpu.memory_space<vmem>>, vector<8x16xf32>
    %1 = arith.truncf %0 : vector<8x16xf32> to vector<8x16xbf16>
    %c0_1 = arith.constant 0 : index
    %c0_2 = arith.constant 0 : index
    %2 = vector.load %arg2[%c0_1, %c0_2] : memref<32x16xbf16, #tpu.memory_space<vmem>>, vector<32x16xbf16>
    %cst = arith.constant dense<0.000000e+00> : vector<32x8xf32>
    %3 = tpu.matmul %2, %1, %cst {dimension_numbers = #tpu.dot_dimension_numbers<[1], [1], [0], [0], [0, 0, 1, 0], [], []>} : vector<32x16xbf16>, vector<8x16xbf16>, vector<32x8xf32> -> vector<32x8xf32>
    %c0_3 = arith.constant 0 : index
    %c0_4 = arith.constant 0 : index
    %4 = vector.load %arg3[%c0_3, %c0_4] : memref<32x1xf32, #tpu.memory_space<vmem>>, vector<32x1xf32>
    %5 = vector.broadcast %4 : vector<32x1xf32> to vector<32x8xf32>
    %6 = arith.addf %3, %5 : vector<32x8xf32>
    %cst_5 = arith.constant 0.000000e+00 : f32
    %7 = vector.broadcast %cst_5 : f32 to vector<32x8xf32>
    %8 = arith.minimumf %6, %7 : vector<32x8xf32>
    %9 = math.exp %8 : vector<32x8xf32>
    %cst_6 = arith.constant 1.000000e+00 : f32
    %10 = vector.broadcast %cst_6 : f32 to vector<32x8xf32>
    %11 = arith.subf %9, %10 : vector<32x8xf32>
    %cst_7 = arith.constant 2.000000e-01 : f32
    %12 = vector.broadcast %cst_7 : f32 to vector<32x8xf32>
    %13 = arith.mulf %12, %11 : vector<32x8xf32>
    %cst_8 = arith.constant 0.000000e+00 : f32
    %14 = vector.broadcast %cst_8 : f32 to vector<32x8xf32>
    %15 = arith.cmpf ogt, %6, %14 : vector<32x8xf32>
    %16 = arith.select %15, %6, %13 : vector<32x8xi1>, vector<32x8xf32>
    %17 = arith.truncf %16 : vector<32x8xf32> to vector<32x8xbf16>
    %c0_9 = arith.constant 0 : index
    %c0_10 = arith.constant 0 : index
    %18 = vector.load %arg4[%c0_9, %c0_10] : memref<32x32xbf16, #tpu.memory_space<vmem>>, vector<32x32xbf16>
    %cst_11 = arith.constant dense<0.000000e+00> : vector<32x8xf32>
    %19 = tpu.matmul %18, %17, %cst_11 {dimension_numbers = #tpu.dot_dimension_numbers<[1], [0], [0], [1], [0, 0, 1, 1], [], []>} : vector<32x32xbf16>, vector<32x8xbf16>, vector<32x8xf32> -> vector<32x8xf32>
    %c0_12 = arith.constant 0 : index
    %c0_13 = arith.constant 0 : index
    %20 = vector.load %arg5[%c0_12, %c0_13] : memref<32x1xf32, #tpu.memory_space<vmem>>, vector<32x1xf32>
    %21 = vector.broadcast %20 : vector<32x1xf32> to vector<32x8xf32>
    %22 = arith.addf %19, %21 : vector<32x8xf32>
    %cst_14 = arith.constant 0.000000e+00 : f32
    %23 = vector.broadcast %cst_14 : f32 to vector<32x8xf32>
    %24 = arith.minimumf %22, %23 : vector<32x8xf32>
    %25 = math.exp %24 : vector<32x8xf32>
    %cst_15 = arith.constant 1.000000e+00 : f32
    %26 = vector.broadcast %cst_15 : f32 to vector<32x8xf32>
    %27 = arith.subf %25, %26 : vector<32x8xf32>
    %cst_16 = arith.constant 2.000000e-01 : f32
    %28 = vector.broadcast %cst_16 : f32 to vector<32x8xf32>
    %29 = arith.mulf %28, %27 : vector<32x8xf32>
    %cst_17 = arith.constant 0.000000e+00 : f32
    %30 = vector.broadcast %cst_17 : f32 to vector<32x8xf32>
    %31 = arith.cmpf ogt, %22, %30 : vector<32x8xf32>
    %32 = arith.select %31, %22, %29 : vector<32x8xi1>, vector<32x8xf32>
    %33 = arith.truncf %32 : vector<32x8xf32> to vector<32x8xbf16>
    %c0_18 = arith.constant 0 : index
    %c0_19 = arith.constant 0 : index
    %34 = vector.load %arg6[%c0_18, %c0_19] : memref<32x32xbf16, #tpu.memory_space<vmem>>, vector<32x32xbf16>
    %cst_20 = arith.constant dense<0.000000e+00> : vector<32x8xf32>
    %35 = tpu.matmul %34, %33, %cst_20 {dimension_numbers = #tpu.dot_dimension_numbers<[1], [0], [0], [1], [0, 0, 1, 1], [], []>} : vector<32x32xbf16>, vector<32x8xbf16>, vector<32x8xf32> -> vector<32x8xf32>
    %c0_21 = arith.constant 0 : index
    %c0_22 = arith.constant 0 : index
    %36 = vector.load %arg7[%c0_21, %c0_22] : memref<32x1xf32, #tpu.memory_space<vmem>>, vector<32x1xf32>
    %37 = vector.broadcast %36 : vector<32x1xf32> to vector<32x8xf32>
    %38 = arith.addf %35, %37 : vector<32x8xf32>
    %cst_23 = arith.constant 0.000000e+00 : f32
    %39 = vector.broadcast %cst_23 : f32 to vector<32x8xf32>
    %40 = arith.minimumf %38, %39 : vector<32x8xf32>
    %41 = math.exp %40 : vector<32x8xf32>
    %cst_24 = arith.constant 1.000000e+00 : f32
    %42 = vector.broadcast %cst_24 : f32 to vector<32x8xf32>
    %43 = arith.subf %41, %42 : vector<32x8xf32>
    %cst_25 = arith.constant 2.000000e-01 : f32
    %44 = vector.broadcast %cst_25 : f32 to vector<32x8xf32>
    %45 = arith.mulf %44, %43 : vector<32x8xf32>
    %cst_26 = arith.constant 0.000000e+00 : f32
    %46 = vector.broadcast %cst_26 : f32 to vector<32x8xf32>
    %47 = arith.cmpf ogt, %38, %46 : vector<32x8xf32>
    %48 = arith.select %47, %38, %45 : vector<32x8xi1>, vector<32x8xf32>
    %49 = arith.truncf %48 : vector<32x8xf32> to vector<32x8xbf16>
    %c0_27 = arith.constant 0 : index
    %c0_28 = arith.constant 0 : index
    %50 = vector.load %arg8[%c0_27, %c0_28] : memref<4x32xbf16, #tpu.memory_space<vmem>>, vector<4x32xbf16>
    %cst_29 = arith.constant dense<0.000000e+00> : vector<4x8xf32>
    %51 = tpu.matmul %50, %49, %cst_29 {dimension_numbers = #tpu.dot_dimension_numbers<[1], [0], [0], [1], [0, 0, 1, 1], [], []>} : vector<4x32xbf16>, vector<32x8xbf16>, vector<4x8xf32> -> vector<4x8xf32>
    %c0_30 = arith.constant 0 : index
    %c0_31 = arith.constant 0 : index
    %52 = vector.load %arg9[%c0_30, %c0_31] : memref<4x1xf32, #tpu.memory_space<vmem>>, vector<4x1xf32>
    %53 = vector.broadcast %52 : vector<4x1xf32> to vector<4x8xf32>
    %54 = arith.addf %51, %53 : vector<4x8xf32>
    %c0_32 = arith.constant 0 : index
    %c0_33 = arith.constant 0 : index
    %55 = vector.load %arg10[%c0_32, %c0_33] : memref<4x8xf32, #tpu.memory_space<vmem>>, vector<4x8xf32>
    tpu.vector_store %arg10[%c0_32, %c0_33], %54 {strides = array<i32>} : memref<4x8xf32, #tpu.memory_space<vmem>>, vector<4x8xf32>,
    return
  }
  func.func @transform_0(%arg0: i32) -> (i32, i32) {
    %c0_i32 = arith.constant 0 : i32
    %c0_i32_0 = arith.constant 0 : i32
    return %arg0, %c0_i32 : i32, i32
  }
  func.func @transform_1(%arg0: i32) -> (i32, i32) {
    %c0_i32 = arith.constant 0 : i32
    %c0_i32_0 = arith.constant 0 : i32
    %c0_i32_1 = arith.constant 0 : i32
    return %c0_i32, %c0_i32_0 : i32, i32
  }
  func.func @transform_2(%arg0: i32) -> (i32, i32) {
    %c0_i32 = arith.constant 0 : i32
    %c0_i32_0 = arith.constant 0 : i32
    %c0_i32_1 = arith.constant 0 : i32
    return %c0_i32, %c0_i32_0 : i32, i32
  }
  func.func @transform_3(%arg0: i32) -> (i32, i32) {
    %c0_i32 = arith.constant 0 : i32
    %c0_i32_0 = arith.constant 0 : i32
    %c0_i32_1 = arith.constant 0 : i32
    return %c0_i32, %c0_i32_0 : i32, i32
  }
  func.func @transform_4(%arg0: i32) -> (i32, i32) {
    %c0_i32 = arith.constant 0 : i32
    %c0_i32_0 = arith.constant 0 : i32
    %c0_i32_1 = arith.constant 0 : i32
    return %c0_i32, %c0_i32_0 : i32, i32
  }
  func.func @transform_5(%arg0: i32) -> (i32, i32) {
    %c0_i32 = arith.constant 0 : i32
    %c0_i32_0 = arith.constant 0 : i32
    %c0_i32_1 = arith.constant 0 : i32
    return %c0_i32, %c0_i32_0 : i32, i32
  }
  func.func @transform_6(%arg0: i32) -> (i32, i32) {
    %c0_i32 = arith.constant 0 : i32
    %c0_i32_0 = arith.constant 0 : i32
    %c0_i32_1 = arith.constant 0 : i32
    return %c0_i32, %c0_i32_0 : i32, i32
  }
  func.func @transform_7(%arg0: i32) -> (i32, i32) {
    %c0_i32 = arith.constant 0 : i32
    %c0_i32_0 = arith.constant 0 : i32
    %c0_i32_1 = arith.constant 0 : i32
    return %c0_i32, %c0_i32_0 : i32, i32
  }
  func.func @transform_8(%arg0: i32) -> (i32, i32) {
    %c0_i32 = arith.constant 0 : i32
    %c0_i32_0 = arith.constant 0 : i32
    %c0_i32_1 = arith.constant 0 : i32
    return %c0_i32, %c0_i32_0 : i32, i32
  }
  func.func @transform_9(%arg0: i32) -> (i32, i32) {
    %c0_i32 = arith.constant 0 : i32
    %c0_i32_0 = arith.constant 0 : i32
    return %c0_i32, %arg0 : i32, i32
  }
}

</mosaic_0001>

<llo_original>
// kernel: generator25g_forward.1
$region0: #{generator25g_forward.1}
  #allocation0 [shape = 'u32[]', space=smem, size = 0x4, offset = 0x4, fixed_abs, tag = 'smem constant byte address 0x4 - core index']
  #allocation1 [shape = 'u32[144,128]{1,0:T(1,128)}', space=vmem, size = 0x12000, scoped, tag = 'internal scratch']
  %s0 = inlined_call_operand.vmem [shape: f32[8,16], index: 0, kind: input, shape index: {}]
  %s1 = inlined_call_operand.vmem [shape: bf16[32,16], index: 1, kind: input, shape index: {}]
  %s2 = inlined_call_operand.vmem [shape: f32[32,1], index: 2, kind: input, shape index: {}]
  %s3 = inlined_call_operand.vmem [shape: bf16[32,32], index: 3, kind: input, shape index: {}]
  %s4 = inlined_call_operand.vmem [shape: f32[32,1], index: 4, kind: input, shape index: {}]
  %s5 = inlined_call_operand.vmem [shape: bf16[32,32], index: 5, kind: input, shape index: {}]
  %s6 = inlined_call_operand.vmem [shape: f32[32,1], index: 6, kind: input, shape index: {}]
  %s7 = inlined_call_operand.vmem [shape: bf16[4,32], index: 7, kind: input, shape index: {}]
  %s8 = inlined_call_operand.vmem [shape: f32[4,1], index: 8, kind: input, shape index: {}]
  %s9 = inlined_call_operand.hbm [shape: f32[4,8], index: 9, kind: output, shape index: {}]
  %s10 = sld [smem:[#allocation0]]
  $region46: #{generator25g_forward.1} parent=0
    _
  %s12 = ssub.s32 1, %s10
  %s13 = scalar_select 0, %s12, %s10
  $region1: #{generator25g_forward.1} parent=0
    #allocation2 [shape = 'u8[2048]{0}', space=vmem, size = 0x800, scoped, tag = 'output window, operand 0, single buffered']
    #allocation3 [shape = 's32[1]{0}', space=sflag, size = 0x4, scoped, tag = 'scoped memory for generator25g_forward.1']
    %14 = vsyncpa [#allocation3], 0
    // Predicated region
    $region2: #{generator25g_forward.1} parent=1 // pred_check
      _
    $region3: #{generator25g_forward.1} parent=1 // pred_check_branch
      %16 = sbr.rel (0) target = $region5
    $region4: #{generator25g_forward.1} parent=1 // pred_region
      _
    $region5: #{generator25g_forward.1} parent=1 // pred_fallthru
      _
    // Predicated region
    $region6: #{generator25g_forward.1} parent=1 // pred_check
      _
    $region7: #{generator25g_forward.1} parent=1 // pred_check_branch
      %18 = sbr.rel (0) target = $region9
    $region8: #{generator25g_forward.1} parent=1 // pred_region
      _
    $region9: #{generator25g_forward.1} parent=1 // pred_fallthru
      _
    // Predicated region
    $region10: #{generator25g_forward.1} parent=1 // pred_check
      _
    $region11: #{generator25g_forward.1} parent=1 // pred_check_branch
      %20 = sbr.rel (0) target = $region13
    $region12: #{generator25g_forward.1} parent=1 // pred_region
      _
    $region13: #{generator25g_forward.1} parent=1 // pred_fallthru
      _
    // Predicated region
    $region14: #{generator25g_forward.1} parent=1 // pred_check
      _
    $region15: #{generator25g_forward.1} parent=1 // pred_check_branch
      %22 = sbr.rel (0) target = $region17
    $region16: #{generator25g_forward.1} parent=1 // pred_region
      _
    $region17: #{generator25g_forward.1} parent=1 // pred_fallthru
      _
    // Predicated region
    $region18: #{generator25g_forward.1} parent=1 // pred_check
      _
    $region19: #{generator25g_forward.1} parent=1 // pred_check_branch
      %24 = sbr.rel (0) target = $region21
    $region20: #{generator25g_forward.1} parent=1 // pred_region
      _
    $region21: #{generator25g_forward.1} parent=1 // pred_fallthru
      _
    // Predicated region
    $region22: #{generator25g_forward.1} parent=1 // pred_check
      _
    $region23: #{generator25g_forward.1} parent=1 // pred_check_branch
      %26 = sbr.rel (0) target = $region25
    $region24: #{generator25g_forward.1} parent=1 // pred_region
      _
    $region25: #{generator25g_forward.1} parent=1 // pred_fallthru
      _
    // Predicated region
    $region26: #{generator25g_forward.1} parent=1 // pred_check
      _
    $region27: #{generator25g_forward.1} parent=1 // pred_check_branch
      %28 = sbr.rel (0) target = $region29
    $region28: #{generator25g_forward.1} parent=1 // pred_region
      _
    $region29: #{generator25g_forward.1} parent=1 // pred_fallthru
      _
    // Predicated region
    $region30: #{generator25g_forward.1} parent=1 // pred_check
      _
    $region31: #{generator25g_forward.1} parent=1 // pred_check_branch
      %30 = sbr.rel (0) target = $region33
    $region32: #{generator25g_forward.1} parent=1 // pred_region
      _
    $region33: #{generator25g_forward.1} parent=1 // pred_fallthru
      _
    // Predicated region
    $region34: #{generator25g_forward.1} parent=1 // pred_check
      _
    $region35: #{generator25g_forward.1} parent=1 // pred_check_branch
      %32 = sbr.rel (0) target = $region37
    $region36: #{generator25g_forward.1} parent=1 // pred_region
      _
    $region37: #{generator25g_forward.1} parent=1 // pred_fallthru
      _
    %v34 = vld [vmem:[%s0] sm:$0xff]
    %v35 = vpack.c.bf16 %v34, %v34
    %v36 = vld [vmem:[%s1] sm:$0xf]
    %v37 = vld [vmem:[%s1 + $0x4] sm:$0xf]
    %v38 = vld [vmem:[%s1 + $0x8] sm:$0xf]
    %v39 = vld [vmem:[%s1 + $0xc] sm:$0xf]
    %v40 = vld [vmem:[%s2] sm:$0xff]
    %v41 = vld [vmem:[%s2 + $0x8] sm:$0xff]
    %v42 = vld [vmem:[%s2 + $0x10] sm:$0xff]
    %v43 = vld [vmem:[%s2 + $0x18] sm:$0xff]
    %45 = vset.pattern.permute.xlu0 0
    %46 = vperm.xlu0 %45, %v40
    %v47 = vpop.permute.xlu0 %46
    %50 = vset.pattern.permute.xlu0 0
    %51 = vperm.xlu0 %50, %v41
    %v52 = vpop.permute.xlu0 %51
    %55 = vset.pattern.permute.xlu0 0
    %56 = vperm.xlu0 %55, %v42
    %v57 = vpop.permute.xlu0 %56
    %60 = vset.pattern.permute.xlu0 0
    %61 = vperm.xlu0 %60, %v43
    %v62 = vpop.permute.xlu0 %61
    %v68 = vunpack.c.l.b16 %v36
    %v69 = vunpack.c.l.b16 %v37
    %v70 = vunpack.c.l.b16 %v38
    %v71 = vunpack.c.l.b16 %v39
    %v72 = vpack.c.b16 %v69, %v68
    %v73 = vpack.c.b16 %v71, %v70
    %vm74 = vcmask 130048
    %v76 = vsel %vm74, %v72, 0
    %v79 = vsel %vm74, %v73, 0
    %v82 = vsel %vm74, %v35, 0
    %84 = vmatprep.subr.bf16.mxu0 0
    %85 = vmatpush1.bf16.xpose.msra.mxu0 %v82
    %86 = vmatprep.subr.bf16.mxu0 0
    %87 = vmatpush1.bf16.xpose.msra.mxu0 0
    %88 = vmatprep.subr.bf16.mxu0 0
    %89 = vmatpush1.bf16.xpose.msra.mxu0 0
    %90 = vmatprep.subr.bf16.mxu0 0
    %91 = vmatpush1.bf16.xpose.msra.mxu0 0
    %92 = vmatprep.subr.bf16.mxu0 0
    %93 = vmatpush1.bf16.xpose.msra.mxu0 0
    %94 = vmatprep.subr.bf16.mxu0 0
    %95 = vmatpush1.bf16.xpose.msra.mxu0 0
    %96 = vmatprep.subr.bf16.mxu0 0
    %97 = vmatpush1.bf16.xpose.msra.mxu0 0
    %98 = vmatprep.subr.bf16.mxu0 0
    %99 = vmatpush1.bf16.xpose.msra.mxu0 0
    %100 = vmatprep.subr.bf16.mxu0 0
    %101 = vmatpush1.bf16.xpose.msra.mxu0 0
    %102 = vmatprep.subr.bf16.mxu0 0
    %103 = vmatpush1.bf16.xpose.msra.mxu0 0
    %104 = vmatprep.subr.bf16.mxu0 0
    %105 = vmatpush1.bf16.xpose.msra.mxu0 0
    %106 = vmatprep.subr.bf16.mxu0 0
    %107 = vmatpush1.bf16.xpose.msra.mxu0 0
    %108 = vmatprep.subr.bf16.mxu0 0
    %109 = vmatpush1.bf16.xpose.msra.mxu0 0
    %110 = vmatprep.subr.bf16.mxu0 0
    %111 = vmatpush1.bf16.xpose.msra.mxu0 0
    %112 = vmatprep.subr.bf16.mxu0 0
    %113 = vmatpush1.bf16.xpose.msra.mxu0 0
    %114 = vmatprep.subr.bf16.mxu0 0
    %115 = vmatpush1.bf16.xpose.msra.mxu0 0
    %116 = vmatprep.mubr.bf16.mxu0 0
    %117 = vmatmul.mubr.bf16.gmra.mrb[0].mxu0 %v76
    %v118 = vpop.f32.mrb[0].mxu0
    %v119 = vadd.f32 %v47, %v118
    %v120 = vpop.f32.mrb[0].mxu0
    %v121 = vpop.f32.mrb[0].mxu0
    %v122 = vadd.f32 %v52, %v121
    %v123 = vpop.f32.mrb[0].mxu0
    %124 = vmatprep.mubr.bf16.mxu0 0
    %125 = vmatmul.mubr.bf16.gmra.mrb[0].mxu0 %v79
    %v126 = vpop.f32.mrb[0].mxu0
    %v127 = vadd.f32 %v57, %v126
    %v128 = vpop.f32.mrb[0].mxu0
    %v129 = vpop.f32.mrb[0].mxu0
    %v130 = vadd.f32 %v62, %v129
    %v131 = vpop.f32.mrb[0].mxu0
    %132 = vdwg.mxu0
    %v133 = vmin.f32 %v119, 0.0
    %v134 = vmin.f32 %v122, 0.0
    %v135 = vmin.f32 %v127, 0.0
    %v136 = vmin.f32 %v130, 0.0
    %v137 = vmul.f32 %v133, 1.442695
    %v138 = vpow.pop %v137
    %v139 = vmul.f32 %v134, 1.442695
    %v140 = vpow.pop %v139
    %v141 = vmul.f32 %v135, 1.442695
    %v142 = vpow.pop %v141
    %v143 = vmul.f32 %v136, 1.442695
    %v144 = vpow.pop %v143
    %v145 = vsub.f32 %v138, 1.0
    %v146 = vsub.f32 %v140, 1.0
    %v147 = vsub.f32 %v142, 1.0
    %v148 = vsub.f32 %v144, 1.0
    %v149 = vmul.f32 %v145, 0.2
    %v150 = vmul.f32 %v146, 0.2
    %v151 = vmul.f32 %v147, 0.2
    %v152 = vmul.f32 %v148, 0.2
    %vm153 = vcmp.gt.f32.partialorder %v119, 0.0
    %vm154 = vcmp.gt.f32.partialorder %v122, 0.0
    %vm155 = vcmp.gt.f32.partialorder %v127, 0.0
    %vm156 = vcmp.gt.f32.partialorder %v130, 0.0
    %v157 = vsel %vm153, %v119, %v149
    %v158 = vsel %vm154, %v122, %v150
    %v159 = vsel %vm155, %v127, %v151
    %v160 = vsel %vm156, %v130, %v152
    %v161 = vpack.c.bf16 %v158, %v157
    %v162 = vpack.c.bf16 %v160, %v159
    %v163 = vld [vmem:[%s3] sm:$0xf]
    %v164 = vld [vmem:[%s3 + $0x4] sm:$0xf]
    %v165 = vld [vmem:[%s3 + $0x8] sm:$0xf]
    %v166 = vld [vmem:[%s3 + $0xc] sm:$0xf]
    %v167 = vld [vmem:[%s4] sm:$0xff]
    %v168 = vld [vmem:[%s4 + $0x8] sm:$0xff]
    %v169 = vld [vmem:[%s4 + $0x10] sm:$0xff]
    %v170 = vld [vmem:[%s4 + $0x18] sm:$0xff]
    %172 = vset.pattern.permute.xlu0 0
    %173 = vperm.xlu0 %172, %v167
    %v174 = vpop.permute.xlu0 %173
    %177 = vset.pattern.permute.xlu0 0
    %178 = vperm.xlu0 %177, %v168
    %v179 = vpop.permute.xlu0 %178
    %182 = vset.pattern.permute.xlu0 0
    %183 = vperm.xlu0 %182, %v169
    %v184 = vpop.permute.xlu0 %183
    %187 = vset.pattern.permute.xlu0 0
    %188 = vperm.xlu0 %187, %v170
    %v189 = vpop.permute.xlu0 %188
    %v195 = vunpack.c.l.b16 %v163
    %v196 = vunpack.c.l.b16 %v164
    %v197 = vunpack.c.l.b16 %v165
    %v198 = vunpack.c.l.b16 %v166
    %v199 = vpack.c.b16 %v196, %v195
    %v200 = vpack.c.b16 %v198, %v197
    %vm201 = vcmask 261120
    %v203 = vsel %vm201, %v199, 0
    %v206 = vsel %vm201, %v200, 0
    %208 = vmatprep.subr.bf16.mxu0 0
    %209 = vmatpush1.bf16.msra.mxu0 %v161
    %210 = vmatprep.subr.bf16.mxu0 0
    %211 = vmatpush1.bf16.msra.mxu0 %v162
    %212 = vmatprep.subr.bf16.mxu0 0
    %213 = vmatpush1.bf16.msra.mxu0 0
    %214 = vmatprep.subr.bf16.mxu0 0
    %215 = vmatpush1.bf16.msra.mxu0 0
    %216 = vmatprep.subr.bf16.mxu0 0
    %217 = vmatpush1.bf16.msra.mxu0 0
    %218 = vmatprep.subr.bf16.mxu0 0
    %219 = vmatpush1.bf16.msra.mxu0 0
    %220 = vmatprep.subr.bf16.mxu0 0
    %221 = vmatpush1.bf16.msra.mxu0 0
    %222 = vmatprep.subr.bf16.mxu0 0
    %223 = vmatpush1.bf16.msra.mxu0 0
    %224 = vmatprep.subr.bf16.mxu0 0
    %225 = vmatpush1.bf16.msra.mxu0 0
    %226 = vmatprep.subr.bf16.mxu0 0
    %227 = vmatpush1.bf16.msra.mxu0 0
    %228 = vmatprep.subr.bf16.mxu0 0
    %229 = vmatpush1.bf16.msra.mxu0 0
    %230 = vmatprep.subr.bf16.mxu0 0
    %231 = vmatpush1.bf16.msra.mxu0 0
    %232 = vmatprep.subr.bf16.mxu0 0
    %233 = vmatpush1.bf16.msra.mxu0 0
    %234 = vmatprep.subr.bf16.mxu0 0
    %235 = vmatpush1.bf16.msra.mxu0 0
    %236 = vmatprep.subr.bf16.mxu0 0
    %237 = vmatpush1.bf16.msra.mxu0 0
    %238 = vmatprep.subr.bf16.mxu0 0
    %239 = vmatpush1.bf16.msra.mxu0 0
    %240 = vmatprep.mubr.bf16.mxu0 0
    %241 = vmatmul.mubr.bf16.gmra.mrb[0].mxu0 %v203
    %v242 = vpop.f32.mrb[0].mxu0
    %v243 = vadd.f32 %v174, %v242
    %v244 = vpop.f32.mrb[0].mxu0
    %v245 = vpop.f32.mrb[0].mxu0
    %v246 = vadd.f32 %v179, %v245
    %v247 = vpop.f32.mrb[0].mxu0
    %248 = vmatprep.mubr.bf16.mxu0 0
    %249 = vmatmul.mubr.bf16.gmra.mrb[0].mxu0 %v206
    %v250 = vpop.f32.mrb[0].mxu0
    %v251 = vadd.f32 %v184, %v250
    %v252 = vpop.f32.mrb[0].mxu0
    %v253 = vpop.f32.mrb[0].mxu0
    %v254 = vadd.f32 %v189, %v253
    %v255 = vpop.f32.mrb[0].mxu0
    %256 = vdwg.mxu0
    %v257 = vmin.f32 %v243, 0.0
    %v258 = vmin.f32 %v246, 0.0
    %v259 = vmin.f32 %v251, 0.0
    %v260 = vmin.f32 %v254, 0.0
    %v261 = vmul.f32 %v257, 1.442695
    %v262 = vpow.pop %v261
    %v263 = vmul.f32 %v258, 1.442695
    %v264 = vpow.pop %v263
    %v265 = vmul.f32 %v259, 1.442695
    %v266 = vpow.pop %v265
    %v267 = vmul.f32 %v260, 1.442695
    %v268 = vpow.pop %v267
    %v269 = vsub.f32 %v262, 1.0
    %v270 = vsub.f32 %v264, 1.0
    %v271 = vsub.f32 %v266, 1.0
    %v272 = vsub.f32 %v268, 1.0
    %v273 = vmul.f32 %v269, 0.2
    %v274 = vmul.f32 %v270, 0.2
    %v275 = vmul.f32 %v271, 0.2
    %v276 = vmul.f32 %v272, 0.2
    %vm277 = vcmp.gt.f32.partialorder %v243, 0.0
    %vm278 = vcmp.gt.f32.partialorder %v246, 0.0
    %vm279 = vcmp.gt.f32.partialorder %v251, 0.0
    %vm280 = vcmp.gt.f32.partialorder %v254, 0.0
    %v281 = vsel %vm277, %v243, %v273
    %v282 = vsel %vm278, %v246, %v274
    %v283 = vsel %vm279, %v251, %v275
    %v284 = vsel %vm280, %v254, %v276
    %v285 = vpack.c.bf16 %v282, %v281
    %v286 = vpack.c.bf16 %v284, %v283
    %v287 = vld [vmem:[%s5] sm:$0xf]
    %v288 = vld [vmem:[%s5 + $0x4] sm:$0xf]
    %v289 = vld [vmem:[%s5 + $0x8] sm:$0xf]
    %v290 = vld [vmem:[%s5 + $0xc] sm:$0xf]
    %v291 = vld [vmem:[%s6] sm:$0xff]
    %v292 = vld [vmem:[%s6 + $0x8] sm:$0xff]
    %v293 = vld [vmem:[%s6 + $0x10] sm:$0xff]
    %v294 = vld [vmem:[%s6 + $0x18] sm:$0xff]
    %296 = vset.pattern.permute.xlu0 0
    %297 = vperm.xlu0 %296, %v291
    %v298 = vpop.permute.xlu0 %297
    %301 = vset.pattern.permute.xlu0 0
    %302 = vperm.xlu0 %301, %v292
    %v303 = vpop.permute.xlu0 %302
    %306 = vset.pattern.permute.xlu0 0
    %307 = vperm.xlu0 %306, %v293
    %v308 = vpop.permute.xlu0 %307
    %311 = vset.pattern.permute.xlu0 0
    %312 = vperm.xlu0 %311, %v294
    %v313 = vpop.permute.xlu0 %312
    %v319 = vunpack.c.l.b16 %v287
    %v320 = vunpack.c.l.b16 %v288
    %v321 = vunpack.c.l.b16 %v289
    %v322 = vunpack.c.l.b16 %v290
    %v323 = vpack.c.b16 %v320, %v319
    %v324 = vpack.c.b16 %v322, %v321
    %v326 = vsel %vm201, %v323, 0
    %v329 = vsel %vm201, %v324, 0
    %331 = vmatprep.subr.bf16.mxu0 0
    %332 = vmatpush1.bf16.msra.mxu0 %v285
    %333 = vmatprep.subr.bf16.mxu0 0
    %334 = vmatpush1.bf16.msra.mxu0 %v286
    %335 = vmatprep.subr.bf16.mxu0 0
    %336 = vmatpush1.bf16.msra.mxu0 0
    %337 = vmatprep.subr.bf16.mxu0 0
    %338 = vmatpush1.bf16.msra.mxu0 0
    %339 = vmatprep.subr.bf16.mxu0 0
    %340 = vmatpush1.bf16.msra.mxu0 0
    %341 = vmatprep.subr.bf16.mxu0 0
    %342 = vmatpush1.bf16.msra.mxu0 0
    %343 = vmatprep.subr.bf16.mxu0 0
    %344 = vmatpush1.bf16.msra.mxu0 0
    %345 = vmatprep.subr.bf16.mxu0 0
    %346 = vmatpush1.bf16.msra.mxu0 0
    %347 = vmatprep.subr.bf16.mxu0 0
    %348 = vmatpush1.bf16.msra.mxu0 0
    %349 = vmatprep.subr.bf16.mxu0 0
    %350 = vmatpush1.bf16.msra.mxu0 0
    %351 = vmatprep.subr.bf16.mxu0 0
    %352 = vmatpush1.bf16.msra.mxu0 0
    %353 = vmatprep.subr.bf16.mxu0 0
    %354 = vmatpush1.bf16.msra.mxu0 0
    %355 = vmatprep.subr.bf16.mxu0 0
    %356 = vmatpush1.bf16.msra.mxu0 0
    %357 = vmatprep.subr.bf16.mxu0 0
    %358 = vmatpush1.bf16.msra.mxu0 0
    %359 = vmatprep.subr.bf16.mxu0 0
    %360 = vmatpush1.bf16.msra.mxu0 0
    %361 = vmatprep.subr.bf16.mxu0 0
    %362 = vmatpush1.bf16.msra.mxu0 0
    %363 = vmatprep.mubr.bf16.mxu0 0
    %364 = vmatmul.mubr.bf16.gmra.mrb[0].mxu0 %v326
    %v365 = vpop.f32.mrb[0].mxu0
    %v366 = vadd.f32 %v298, %v365
    %v367 = vpop.f32.mrb[0].mxu0
    %v368 = vpop.f32.mrb[0].mxu0
    %v369 = vadd.f32 %v303, %v368
    %v370 = vpop.f32.mrb[0].mxu0
    %371 = vmatprep.mubr.bf16.mxu0 0
    %372 = vmatmul.mubr.bf16.gmra.mrb[0].mxu0 %v329
    %v373 = vpop.f32.mrb[0].mxu0
    %v374 = vadd.f32 %v308, %v373
    %v375 = vpop.f32.mrb[0].mxu0
    %v376 = vpop.f32.mrb[0].mxu0
    %v377 = vadd.f32 %v313, %v376
    %v378 = vpop.f32.mrb[0].mxu0
    %379 = vdwg.mxu0
    %v380 = vmin.f32 %v366, 0.0
    %v381 = vmin.f32 %v369, 0.0
    %v382 = vmin.f32 %v374, 0.0
    %v383 = vmin.f32 %v377, 0.0
    %v384 = vmul.f32 %v380, 1.442695
    %v385 = vpow.pop %v384
    %v386 = vmul.f32 %v381, 1.442695
    %v387 = vpow.pop %v386
    %v388 = vmul.f32 %v382, 1.442695
    %v389 = vpow.pop %v388
    %v390 = vmul.f32 %v383, 1.442695
    %v391 = vpow.pop %v390
    %v392 = vsub.f32 %v385, 1.0
    %v393 = vsub.f32 %v387, 1.0
    %v394 = vsub.f32 %v389, 1.0
    %v395 = vsub.f32 %v391, 1.0
    %v396 = vmul.f32 %v392, 0.2
    %v397 = vmul.f32 %v393, 0.2
    %v398 = vmul.f32 %v394, 0.2
    %v399 = vmul.f32 %v395, 0.2
    %vm400 = vcmp.gt.f32.partialorder %v366, 0.0
    %vm401 = vcmp.gt.f32.partialorder %v369, 0.0
    %vm402 = vcmp.gt.f32.partialorder %v374, 0.0
    %vm403 = vcmp.gt.f32.partialorder %v377, 0.0
    %v404 = vsel %vm400, %v366, %v396
    %v405 = vsel %vm401, %v369, %v397
    %v406 = vsel %vm402, %v374, %v398
    %v407 = vsel %vm403, %v377, %v399
    %v408 = vpack.c.bf16 %v405, %v404
    %v409 = vpack.c.bf16 %v407, %v406
    %v410 = vld [vmem:[%s7] sm:$0x3]
    %v411 = vld [vmem:[%s8] sm:$0xf]
    %413 = vset.pattern.permute.xlu0 0
    %414 = vperm.xlu0 %413, %v411
    %v415 = vpop.permute.xlu0 %414
    %v418 = vsel %vm201, %v410, 0
    %420 = vmatprep.subr.bf16.mxu0 0
    %421 = vmatpush1.bf16.msra.mxu0 %v408
    %422 = vmatprep.subr.bf16.mxu0 0
    %423 = vmatpush1.bf16.msra.mxu0 %v409
    %424 = vmatprep.subr.bf16.mxu0 0
    %425 = vmatpush1.bf16.msra.mxu0 0
    %426 = vmatprep.subr.bf16.mxu0 0
    %427 = vmatpush1.bf16.msra.mxu0 0
    %428 = vmatprep.subr.bf16.mxu0 0
    %429 = vmatpush1.bf16.msra.mxu0 0
    %430 = vmatprep.subr.bf16.mxu0 0
    %431 = vmatpush1.bf16.msra.mxu0 0
    %432 = vmatprep.subr.bf16.mxu0 0
    %433 = vmatpush1.bf16.msra.mxu0 0
    %434 = vmatprep.subr.bf16.mxu0 0
    %435 = vmatpush1.bf16.msra.mxu0 0
    %436 = vmatprep.subr.bf16.mxu0 0
    %437 = vmatpush1.bf16.msra.mxu0 0
    %438 = vmatprep.subr.bf16.mxu0 0
    %439 = vmatpush1.bf16.msra.mxu0 0
    %440 = vmatprep.subr.bf16.mxu0 0
    %441 = vmatpush1.bf16.msra.mxu0 0
    %442 = vmatprep.subr.bf16.mxu0 0
    %443 = vmatpush1.bf16.msra.mxu0 0
    %444 = vmatprep.subr.bf16.mxu0 0
    %445 = vmatpush1.bf16.msra.mxu0 0
    %446 = vmatprep.subr.bf16.mxu0 0
    %447 = vmatpush1.bf16.msra.mxu0 0
    %448 = vmatprep.subr.bf16.mxu0 0
    %449 = vmatpush1.bf16.msra.mxu0 0
    %450 = vmatprep.subr.bf16.mxu0 0
    %451 = vmatpush1.bf16.msra.mxu0 0
    %452 = vmatprep.mubr.bf16.mxu0 0
    %453 = vmatmul.mubr.bf16.gmra.mrb[0].mxu0 %v418
    %v454 = vpop.f32.mrb[0].mxu0
    %v455 = vadd.f32 %v415, %v454
    %v456 = vpop.f32.mrb[0].mxu0
    %v457 = vpop.f32.mrb[0].mxu0
    %v458 = vpop.f32.mrb[0].mxu0
    %459 = vdwg.mxu0
    %vm460 = vcmask 60416
    %461 = vst.msk [vmem:[#allocation2] sm:$0xf] %vm460, %v455
    // Predicated region
    $region38: #{generator25g_forward.1} parent=1 // pred_check
      _
    $region39: #{generator25g_forward.1} parent=1 // pred_check_branch
      %463 = sbr.rel (0) target = $region41
    $region40: #{generator25g_forward.1} parent=1 // pred_region
      %s465 = ssub.s32 64, 64
      %466 = vsyncadd [#allocation3], %s465
      %s468 = sshll.u32 [#allocation2], 4
      %s469 = int_to_ptr.vmem [resolvable:$true] %s468
      %471 = dma.vmem_to_hbm [thread:$0]  %s469, 64, %s9, [#allocation3]
    $region41: #{generator25g_forward.1} parent=1 // pred_fallthru
      _
    // Predicated region
    $region42: #{generator25g_forward.1} parent=1 // pred_check
      _
    $region43: #{generator25g_forward.1} parent=1 // pred_check_branch
      %473 = sbr.rel (0) target = $region45
    $region44: #{generator25g_forward.1} parent=1 // pred_region
      %474 = dma.done [#allocation3], 64
    $region45: #{generator25g_forward.1} parent=1 // pred_fallthru
      _
    %475 = vsyncpa [#allocation3], 1

</llo_original>
